<compile_context>
chip_gen: v6e
topology: v6e:2x2x1
jax: 0.10.0
libtpu: 0.0.40
codegen_flags: <defaults>
</compile_context>

<pallas_src>
import jax
import jax.numpy as jnp
from jax.experimental import pallas as pl
from jax.experimental.pallas import tpu as pltpu


def _round_up(x, m):
    return (x + m - 1) // m * m


def _embed_kernel(idx_ref, table_ref, out_ref, acc_ref):
    # idx_ref:   (TILE, 1)      int32   token ids for this token tile
    # table_ref: (nk, D_pad)    f32     one vocab block of the (padded) table
    # out_ref:   (TILE, D_pad)  f32
    # acc_ref:   (TILE, D_pad)  f32     accumulator across vocab blocks
    k = pl.program_id(1)

    @pl.when(k == 0)
    def _():
        acc_ref[...] = jnp.zeros_like(acc_ref)

    idx = idx_ref[...]                                    # (TILE, 1)
    table = table_ref[...]                                # (nk, D_pad)
    tile, nk = idx.shape[0], table.shape[0]

    # Global row ids covered by this vocab block.
    iota = k * nk + jax.lax.broadcasted_iota(jnp.int32, (tile, nk), 1)
    onehot = (idx == iota).astype(table.dtype)            # (TILE, nk) one-hot rows
    acc_ref[...] += jnp.dot(onehot, table, preferred_element_type=jnp.float32)

    @pl.when(k == pl.num_programs(1) - 1)
    def _():
        out_ref[...] = acc_ref[...].astype(out_ref.dtype)


def sem_id_embed(indices, table, *, tile=256, max_table_block_bytes=8 << 20):
    """Pallas equivalent of SemIdEmbedder.forward: table[indices].

    indices: [B, S] int32, values in [0, N) (or -1 for padding).
    table:   [N, D] float32 embedding table (row N-1 is the zero padding row).
    returns: [B, S, D] float32.
    """
    B, S = indices.shape
    N, D = table.shape
    itemsize = jnp.dtype(table.dtype).itemsize

    # --- alignment / padding ------------------------------------------------
    T = B * S
    tile = max(8, _round_up(tile, 8))
    tile = min(tile, _round_up(T, 8))        # don't pad tiny inputs up to 256 tokens
    T_pad = _round_up(T, tile)

    D_pad = _round_up(D, 128)                # lane-dense output (unmasked stores)
    N_pad = _round_up(N, 256)                # MXU K: fills v6e/v7x 256-wide MXU

    # Vocab block rows: keep each streamed table block <= max_table_block_bytes.
    rows_cap = max(256, (max_table_block_bytes // (D_pad * itemsize)) // 256 * 256)
    if N_pad <= rows_cap:
        nk = N_pad                           # whole table resident (fetched once)
    else:
        nk = rows_cap                        # stream the table in vocab blocks
        N_pad = _round_up(N_pad, nk)

    idx = indices.astype(jnp.int32)
    # padding_idx=-1 convention: negative ids map to the zero row N-1.
    idx = jnp.where(idx < 0, idx + N, idx)
    idx_flat = idx.reshape(T, 1)
    if T_pad != T:
        # Pad the token tail with the zero (padding) row so tail lanes fetch zeros.
        idx_flat = jnp.pad(idx_flat, ((0, T_pad - T), (0, 0)), constant_values=N - 1)

    table_p = table
    if (N_pad, D_pad) != (N, D):
        # Extra rows/cols are zeros; indices never reference rows >= N.
        table_p = jnp.pad(table, ((0, N_pad - N), (0, D_pad - D)))

    # --- explicit VMEM budget -----------------------------------------------
    table_blk_bytes = nk * D_pad * itemsize
    out_blk_bytes = tile * D_pad * itemsize
    idx_blk_bytes = tile * 128 * 4           # (tile, 1) int32, lane-padded
    acc_bytes = tile * D_pad * 4
    vmem_needed = 2 * (table_blk_bytes + out_blk_bytes + idx_blk_bytes) + acc_bytes
    vmem_limit = int(min(vmem_needed + (4 << 20), 64 << 20))

    out = pl.pallas_call(
        _embed_kernel,
        out_shape=jax.ShapeDtypeStruct((T_pad, D_pad), table.dtype),
        grid_spec=pltpu.PrefetchScalarGridSpec(
            num_scalar_prefetch=0,
            grid=(T_pad // tile, N_pad // nk),
            in_specs=[
                pl.BlockSpec((tile, 1), lambda i, k: (i, 0)),    # token-id tile
                pl.BlockSpec((nk, D_pad), lambda i, k: (k, 0)),  # vocab block
            ],
            out_specs=pl.BlockSpec((tile, D_pad), lambda i, k: (i, 0)),
            scratch_shapes=[pltpu.VMEM((tile, D_pad), jnp.float32)],
        ),
        compiler_params=pltpu.CompilerParams(
            dimension_semantics=("parallel", "arbitrary"),
            vmem_limit_bytes=vmem_limit,
        ),
    )(idx_flat, table_p)

    return out[:T, :D].reshape(B, S, D)


def init_sem_id_embedder_params(key, num_embeddings, embeddings_dim):
    """Deterministic init mirroring nn.Embedding(num_embeddings, dim, padding_idx=-1)."""
    table = jax.random.normal(key, (num_embeddings, embeddings_dim), jnp.float32)
    # padding_idx=-1 -> row (num_embeddings - 1) is zeroed.
    table = table.at[num_embeddings - 1].set(0.0)
    return table


if __name__ == "__main__":
    num_embeddings = 32
    embeddings_dim = 32
    B, S = 2, 8

    key = jax.random.PRNGKey(0)
    k_tab, k_idx = jax.random.split(key)

    table = init_sem_id_embedder_params(k_tab, num_embeddings, embeddings_dim)
    # indices in [0, num_embeddings); include the padding row id and a raw -1.
    indices = jax.random.randint(k_idx, (B, S), 0, num_embeddings, jnp.int32)
    indices = indices.at[0, 0].set(num_embeddings - 1)  # explicit padding row
    indices = indices.at[0, 1].set(-1)                  # padding_idx=-1 convention

    out = sem_id_embed(indices, table)
    out = jax.block_until_ready(out)

    # Reference check (plain JAX gather with the same -1 -> N-1 normalization).
    norm_idx = jnp.where(indices < 0, indices + num_embeddings, indices)
    ref = table[norm_idx]
    assert out.shape == (B, S, embeddings_dim)
    assert jnp.allclose(out, ref, atol=1e-5, rtol=1e-5), "mismatch vs reference"
    assert jnp.allclose(out[0, 0], 0.0), "padding row should be zeros"
    assert jnp.allclose(out[0, 1], 0.0), "-1 (padding_idx) should embed to zeros"

    print("KERNEL_OK")
</pallas_src>

<mosaic_0001>
module attributes {stable_mosaic.version = 11 : i64} {
  func.func @_embed_kernel(%arg0: i32, %arg1: i32, %arg2: memref<16x1xi32, #tpu.memory_space<vmem>>, %arg3: memref<256x128xf32, #tpu.memory_space<vmem>>, %arg4: memref<16x128xf32, #tpu.memory_space<vmem>>, %arg5: memref<16x128xf32, #tpu.memory_space<vmem>>) attributes {dimension_semantics = [#tpu.dimension_semantics<parallel>, #tpu.dimension_semantics<arbitrary>], iteration_bounds = array<i64: 1, 1>, scalar_prefetch = 0 : i64, scratch_operands = 1 : i64, tpu.core_type = #tpu.core_type<tc>, window_params = [{transform_indices = @transform_0, window_bounds = array<i64: 16, 1>}, {transform_indices = @transform_1, window_bounds = array<i64: 256, 128>}, {transform_indices = @transform_2, window_bounds = array<i64: 16, 128>}]} {
    %c0_i32 = arith.constant 0 : i32
    %0 = arith.cmpi eq, %arg1, %c0_i32 : i32
    %1 = arith.extui %0 : i1 to i32
    %c0_i32_0 = arith.constant 0 : i32
    %2 = arith.cmpi ne, %1, %c0_i32_0 : i32
    scf.if %2 {
      %cst_10 = arith.constant 0.000000e+00 : f32
      %20 = vector.broadcast %cst_10 : f32 to vector<16x128xf32>
      %c0_11 = arith.constant 0 : index
      %c0_12 = arith.constant 0 : index
      %21 = vector.load %arg5[%c0_11, %c0_12] : memref<16x128xf32, #tpu.memory_space<vmem>>, vector<16x128xf32>
      tpu.vector_store %arg5[%c0_11, %c0_12], %20 {strides = array<i32>} : memref<16x128xf32, #tpu.memory_space<vmem>>, vector<16x128xf32>,
    } else {
    }
    %c0 = arith.constant 0 : index
    %c0_1 = arith.constant 0 : index
    %3 = vector.load %arg2[%c0, %c0_1] : memref<16x1xi32, #tpu.memory_space<vmem>>, vector<16x1xi32>
    %c0_2 = arith.constant 0 : index
    %c0_3 = arith.constant 0 : index
    %4 = vector.load %arg3[%c0_2, %c0_3] : memref<256x128xf32, #tpu.memory_space<vmem>>, vector<256x128xf32>
    %c256_i32 = arith.constant 256 : i32
    %5 = arith.muli %arg1, %c256_i32 : i32
    %6 = tpu.iota {dimensions = array<i32: 1>} : vector<16x256xi32>
    %7 = vector.broadcast %5 : i32 to vector<16x256xi32>
    %8 = arith.addi %7, %6 : vector<16x256xi32>
    %9 = vector.broadcast %3 : vector<16x1xi32> to vector<16x256xi32>
    %10 = arith.cmpi eq, %9, %8 : vector<16x256xi32>
    %11 = arith.extui %10 : vector<16x256xi1> to vector<16x256xi32>
    %12 = arith.sitofp %11 : vector<16x256xi32> to vector<16x256xf32>
    %c0_4 = arith.constant 0 : index
    %c0_5 = arith.constant 0 : index
    %13 = vector.load %arg5[%c0_4, %c0_5] : memref<16x128xf32, #tpu.memory_space<vmem>>, vector<16x128xf32>
    %cst = arith.constant dense<0.000000e+00> : vector<16x128xf32>
    %14 = tpu.matmul %12, %4, %cst {dimension_numbers = #tpu.dot_dimension_numbers<[1], [0], [0], [1], [0, 0, 1, 1], [], []>} : vector<16x256xf32>, vector<256x128xf32>, vector<16x128xf32> -> vector<16x128xf32>
    %15 = arith.addf %13, %14 : vector<16x128xf32>
    %c0_6 = arith.constant 0 : index
    %c0_7 = arith.constant 0 : index
    %16 = vector.load %arg5[%c0_6, %c0_7] : memref<16x128xf32, #tpu.memory_space<vmem>>, vector<16x128xf32>
    tpu.vector_store %arg5[%c0_6, %c0_7], %15 {strides = array<i32>} : memref<16x128xf32, #tpu.memory_space<vmem>>, vector<16x128xf32>,
    %c0_i32_8 = arith.constant 0 : i32
    %17 = arith.cmpi eq, %arg1, %c0_i32_8 : i32
    %18 = arith.extui %17 : i1 to i32
    %c0_i32_9 = arith.constant 0 : i32
    %19 = arith.cmpi ne, %18, %c0_i32_9 : i32
    scf.if %19 {
      %c0_10 = arith.constant 0 : index
      %c0_11 = arith.constant 0 : index
      %20 = vector.load %arg5[%c0_10, %c0_11] : memref<16x128xf32, #tpu.memory_space<vmem>>, vector<16x128xf32>
      %c0_12 = arith.constant 0 : index
      %c0_13 = arith.constant 0 : index
      %21 = vector.load %arg4[%c0_12, %c0_13] : memref<16x128xf32, #tpu.memory_space<vmem>>, vector<16x128xf32>
      tpu.vector_store %arg4[%c0_12, %c0_13], %20 {strides = array<i32>} : memref<16x128xf32, #tpu.memory_space<vmem>>, vector<16x128xf32>,
    } else {
    }
    return
  }
  func.func @transform_0(%arg0: i32, %arg1: i32) -> (i32, i32) {
    %c0_i32 = arith.constant 0 : i32
    %c0_i32_0 = arith.constant 0 : i32
    return %arg0, %c0_i32 : i32, i32
  }
  func.func @transform_1(%arg0: i32, %arg1: i32) -> (i32, i32) {
    %c0_i32 = arith.constant 0 : i32
    %c0_i32_0 = arith.constant 0 : i32
    return %arg1, %c0_i32 : i32, i32
  }
  func.func @transform_2(%arg0: i32, %arg1: i32) -> (i32, i32) {
    %c0_i32 = arith.constant 0 : i32
    %c0_i32_0 = arith.constant 0 : i32
    return %arg0, %c0_i32 : i32, i32
  }
}

</mosaic_0001>

<llo_original>
// kernel: tpu_custom_call.1
$region0: #{tpu_custom_call.1}
  #allocation0 [shape = 'u32[]', space=smem, size = 0x4, offset = 0x4, fixed_abs, tag = 'smem constant byte address 0x4 - core index']
  #allocation1 [shape = 'u32[144,128]{1,0:T(1,128)}', space=vmem, size = 0x12000, scoped, tag = 'internal scratch']
  #allocation2 [shape = 'f32[16,128]{1,0:T(8,128)}', space=vmem, size = 0x2000, scoped, tag = 'scratch operand']
  %s0 = inlined_call_operand.vmem [shape: s32[16,1], index: 0, kind: input, shape index: {}]
  %s1 = inlined_call_operand.hbm [shape: f32[256,128], index: 1, kind: input, shape index: {}]
  %s2 = inlined_call_operand.hbm [shape: f32[16,128], index: 2, kind: output, shape index: {}]
  %s3 = sld [smem:[#allocation0]]
  $region30: #{tpu_custom_call.1} parent=0
    _
  %s5 = ssub.s32 1, %s3
  %s6 = scalar_select 0, %s5, %s3
  $region1: #{tpu_custom_call.1} parent=0
    #allocation3 [shape = 'u8[131072]{0}', space=vmem, size = 0x20000, scoped, tag = 'input window, operand 1, single buffered']
    #allocation4 [shape = 's32[1]{0}', space=sflag, size = 0x4, scoped, tag = 'scoped memory for tpu_custom_call.1']
    #allocation5 [shape = 's32[1]{0}', space=sflag, size = 0x4, scoped, tag = 'scoped memory for tpu_custom_call.1']
    #allocation6 [shape = 'u8[8192]{0}', space=vmem, size = 0x2000, scoped, tag = 'output window, operand 0, single buffered']
    %7 = vsyncpa [#allocation4], 0
    %8 = vsyncpa [#allocation5], 0
    // Predicated region
    $region2: #{tpu_custom_call.1} parent=1 // pred_check
      _
    $region3: #{tpu_custom_call.1} parent=1 // pred_check_branch
      %10 = sbr.rel (0) target = $region5
    $region4: #{tpu_custom_call.1} parent=1 // pred_region
      _
    $region5: #{tpu_custom_call.1} parent=1 // pred_fallthru
      _
    // Predicated region
    $region6: #{tpu_custom_call.1} parent=1 // pred_check
      _
    $region7: #{tpu_custom_call.1} parent=1 // pred_check_branch
      %12 = sbr.rel (0) target = $region9
    $region8: #{tpu_custom_call.1} parent=1 // pred_region
      %s14 = ssub.s32 4096, 4096
      %15 = vsyncadd [#allocation4], %s14
      %s16 = sshll.u32 [#allocation3], 4
      %s17 = int_to_ptr.vmem [resolvable:$true] %s16
      %22 = dma.hbm_to_vmem [thread:$0]  %s1, 4096, %s17, [#allocation4], 128, 128, 8
    $region9: #{tpu_custom_call.1} parent=1 // pred_fallthru
      _
    // Predicated region
    $region10: #{tpu_custom_call.1} parent=1 // pred_check
      _
    $region11: #{tpu_custom_call.1} parent=1 // pred_check_branch
      %24 = sbr.rel (0) target = $region13
    $region12: #{tpu_custom_call.1} parent=1 // pred_region
      %25 = dma.done [#allocation4], 4096
    $region13: #{tpu_custom_call.1} parent=1 // pred_fallthru
      _
    %p26 = scmp.eq.s32.totalorder 0, 0
    // Predicated region
    $region14: #{tpu_custom_call.1} parent=1 // pred_check
      %p27 = pneg %p26
    $region15: #{tpu_custom_call.1} parent=1 // pred_check_branch
      %29 = sbr.rel (%p27) target = $region17
    $region16: #{tpu_custom_call.1} parent=1 // pred_region
      %30 = vst [vmem:[#allocation2] sm:$0xff] 0.0
      %31 = vst [vmem:[#allocation2 + $0x8] sm:$0xff] 0.0
    $region17: #{tpu_custom_call.1} parent=1 // pred_fallthru
      _
    %v32 = vld [vmem:[%s0] sm:$0xff]
    %v33 = vld [vmem:[%s0 + $0x8] sm:$0xff]
    %v34 = vld [vmem:[#allocation3] sm:$0xff]
    %v35 = vld [vmem:[#allocation3 + $0x8] sm:$0xff]
    %v36 = vld [vmem:[#allocation3 + $0x10] sm:$0xff]
    %v37 = vld [vmem:[#allocation3 + $0x18] sm:$0xff]
    %v38 = vld [vmem:[#allocation3 + $0x20] sm:$0xff]
    %v39 = vld [vmem:[#allocation3 + $0x28] sm:$0xff]
    %v40 = vld [vmem:[#allocation3 + $0x30] sm:$0xff]
    %v41 = vld [vmem:[#allocation3 + $0x38] sm:$0xff]
    %v42 = vld [vmem:[#allocation3 + $0x40] sm:$0xff]
    %v43 = vld [vmem:[#allocation3 + $0x48] sm:$0xff]
    %v44 = vld [vmem:[#allocation3 + $0x50] sm:$0xff]
    %v45 = vld [vmem:[#allocation3 + $0x58] sm:$0xff]
    %v46 = vld [vmem:[#allocation3 + $0x60] sm:$0xff]
    %v47 = vld [vmem:[#allocation3 + $0x68] sm:$0xff]
    %v48 = vld [vmem:[#allocation3 + $0x70] sm:$0xff]
    %v49 = vld [vmem:[#allocation3 + $0x78] sm:$0xff]
    %v50 = vld [vmem:[#allocation3 + $0x80] sm:$0xff]
    %v51 = vld [vmem:[#allocation3 + $0x88] sm:$0xff]
    %v52 = vld [vmem:[#allocation3 + $0x90] sm:$0xff]
    %v53 = vld [vmem:[#allocation3 + $0x98] sm:$0xff]
    %v54 = vld [vmem:[#allocation3 + $0xa0] sm:$0xff]
    %v55 = vld [vmem:[#allocation3 + $0xa8] sm:$0xff]
    %v56 = vld [vmem:[#allocation3 + $0xb0] sm:$0xff]
    %v57 = vld [vmem:[#allocation3 + $0xb8] sm:$0xff]
    %v58 = vld [vmem:[#allocation3 + $0xc0] sm:$0xff]
    %v59 = vld [vmem:[#allocation3 + $0xc8] sm:$0xff]
    %v60 = vld [vmem:[#allocation3 + $0xd0] sm:$0xff]
    %v61 = vld [vmem:[#allocation3 + $0xd8] sm:$0xff]
    %v62 = vld [vmem:[#allocation3 + $0xe0] sm:$0xff]
    %v63 = vld [vmem:[#allocation3 + $0xe8] sm:$0xff]
    %v64 = vld [vmem:[#allocation3 + $0xf0] sm:$0xff]
    %v65 = vld [vmem:[#allocation3 + $0xf8] sm:$0xff]
    %s66 = smul.u32 0, 256
    %v67 = vlaneseq
    %v68 = vand.u32 %v67, 127
    %v69 = vadd.s32 %v68, 128
    %v70 = vstv %s66
    %v71 = vadd.s32 %v70, %v68
    %v72 = vadd.s32 %v70, %v69
    %73 = vset.pattern.permute.xlu0 0
    %74 = vperm.xlu0 %73, %v32
    %v75 = vpop.permute.xlu0 %74
    %76 = vset.pattern.permute.xlu0 0
    %77 = vperm.xlu0 %76, %v33
    %v78 = vpop.permute.xlu0 %77
    %vm79 = vcmp.eq.s32.totalorder %v75, %v71
    %vm80 = vcmp.eq.s32.totalorder %v75, %v72
    %vm81 = vcmp.eq.s32.totalorder %v78, %v71
    %vm82 = vcmp.eq.s32.totalorder %v78, %v72
    %v83 = vsel %vm79, 1, 0
    %v84 = vsel %vm80, 1, 0
    %v85 = vsel %vm81, 1, 0
    %v86 = vsel %vm82, 1, 0
    %v87 = vcvt.s32.f32 %v83
    %v88 = vcvt.s32.f32 %v84
    %v89 = vcvt.s32.f32 %v85
    %v90 = vcvt.s32.f32 %v86
    %v91 = vld [vmem:[#allocation2] sm:$0xff]
    %v92 = vld [vmem:[#allocation2 + $0x8] sm:$0xff]
    %93 = vmatprep.subr.mxu0 0.0
    %94 = vmatpush1.msra.mxu0 %v49
    %95 = vmatprep.subr.mxu0 0.0
    %96 = vmatpush1.msra.mxu0 %v48
    %97 = vmatprep.subr.mxu0 0.0
    %98 = vmatpush1.msra.mxu0 %v47
    %99 = vmatprep.subr.mxu0 0.0
    %100 = vmatpush1.msra.mxu0 %v46
    %101 = vmatprep.subr.mxu0 0.0
    %102 = vmatpush1.msra.mxu0 %v45
    %103 = vmatprep.subr.mxu0 0.0
    %104 = vmatpush1.msra.mxu0 %v44
    %105 = vmatprep.subr.mxu0 0.0
    %106 = vmatpush1.msra.mxu0 %v43
    %107 = vmatprep.subr.mxu0 0.0
    %108 = vmatpush1.msra.mxu0 %v42
    %109 = vmatprep.subr.mxu0 0.0
    %110 = vmatpush1.msra.mxu0 %v41
    %111 = vmatprep.subr.mxu0 0.0
    %112 = vmatpush1.msra.mxu0 %v40
    %113 = vmatprep.subr.mxu0 0.0
    %114 = vmatpush1.msra.mxu0 %v39
    %115 = vmatprep.subr.mxu0 0.0
    %116 = vmatpush1.msra.mxu0 %v38
    %117 = vmatprep.subr.mxu0 0.0
    %118 = vmatpush1.msra.mxu0 %v37
    %119 = vmatprep.subr.mxu0 0.0
    %120 = vmatpush1.msra.mxu0 %v36
    %121 = vmatprep.subr.mxu0 0.0
    %122 = vmatpush1.msra.mxu0 %v35
    %123 = vmatprep.subr.mxu0 0.0
    %124 = vmatpush1.msra.mxu0 %v34
    %125 = vmatprep.subr.mxu0 0.0
    %126 = vmatpush2.msra.mxu0 %v65
    %127 = vmatprep.subr.mxu0 0.0
    %128 = vmatpush2.msra.mxu0 %v64
    %129 = vmatprep.subr.mxu0 0.0
    %130 = vmatpush2.msra.mxu0 %v63
    %131 = vmatprep.subr.mxu0 0.0
    %132 = vmatpush2.msra.mxu0 %v62
    %133 = vmatprep.subr.mxu0 0.0
    %134 = vmatpush2.msra.mxu0 %v61
    %135 = vmatprep.subr.mxu0 0.0
    %136 = vmatpush2.msra.mxu0 %v60
    %137 = vmatprep.subr.mxu0 0.0
    %138 = vmatpush2.msra.mxu0 %v59
    %139 = vmatprep.subr.mxu0 0.0
    %140 = vmatpush2.msra.mxu0 %v58
    %141 = vmatprep.subr.mxu0 0.0
    %142 = vmatpush2.msra.mxu0 %v57
    %143 = vmatprep.subr.mxu0 0.0
    %144 = vmatpush2.msra.mxu0 %v56
    %145 = vmatprep.subr.mxu0 0.0
    %146 = vmatpush2.msra.mxu0 %v55
    %147 = vmatprep.subr.mxu0 0.0
    %148 = vmatpush2.msra.mxu0 %v54
    %149 = vmatprep.subr.mxu0 0.0
    %150 = vmatpush2.msra.mxu0 %v53
    %151 = vmatprep.subr.mxu0 0.0
    %152 = vmatpush2.msra.mxu0 %v52
    %153 = vmatprep.subr.mxu0 0.0
    %154 = vmatpush2.msra.mxu0 %v51
    %155 = vmatprep.subr.mxu0 0.0
    %156 = vmatpush2.msra.mxu0 %v50
    %157 = vmatprep.mubr.f32.mxu0 %v88
    %158 = vmatmul.mubr.f32.gmra.mxu0 %v87
    %v159 = vpop.f32.mrf.mxu0
    %v160 = vadd.f32 0.0, %v159
    %v161 = vpop.f32.mrf.mxu0
    %162 = vmatprep.mubr.f32.mxu0 %v90
    %163 = vmatmul.mubr.f32.gmra.mxu0 %v89
    %v164 = vpop.f32.mrf.mxu0
    %v165 = vadd.f32 0.0, %v164
    %v166 = vpop.f32.mrf.mxu0
    %167 = vdwg.mxu0
    %v168 = vadd.f32 %v91, %v160
    %v169 = vadd.f32 %v92, %v165
    %170 = vst [vmem:[#allocation2] sm:$0xff] %v168
    %171 = vst [vmem:[#allocation2 + $0x8] sm:$0xff] %v169
    // Predicated region
    $region18: #{tpu_custom_call.1} parent=1 // pred_check
      %p172 = pneg %p26
    $region19: #{tpu_custom_call.1} parent=1 // pred_check_branch
      %174 = sbr.rel (%p172) target = $region21
    $region20: #{tpu_custom_call.1} parent=1 // pred_region
      %v175 = vld [vmem:[#allocation2] sm:$0xff]
      %v176 = vld [vmem:[#allocation2 + $0x8] sm:$0xff]
      %177 = vst [vmem:[#allocation6] sm:$0xff] %v175
      %178 = vst [vmem:[#allocation6 + $0x8] sm:$0xff] %v176
    $region21: #{tpu_custom_call.1} parent=1 // pred_fallthru
      _
    // Predicated region
    $region22: #{tpu_custom_call.1} parent=1 // pred_check
      _
    $region23: #{tpu_custom_call.1} parent=1 // pred_check_branch
      %180 = sbr.rel (0) target = $region25
    $region24: #{tpu_custom_call.1} parent=1 // pred_region
      %s182 = ssub.s32 256, 256
      %183 = vsyncadd [#allocation5], %s182
      %s184 = sshll.u32 [#allocation6], 4
      %s185 = int_to_ptr.vmem [resolvable:$true] %s184
      %190 = dma.vmem_to_hbm [thread:$0]  %s185, 256, %s2, [#allocation5], 128, 128, 8
    $region25: #{tpu_custom_call.1} parent=1 // pred_fallthru
      _
    // Predicated region
    $region26: #{tpu_custom_call.1} parent=1 // pred_check
      _
    $region27: #{tpu_custom_call.1} parent=1 // pred_check_branch
      %192 = sbr.rel (0) target = $region29
    $region28: #{tpu_custom_call.1} parent=1 // pred_region
      %193 = dma.done [#allocation5], 256
    $region29: #{tpu_custom_call.1} parent=1 // pred_fallthru
      _
    %194 = vsyncpa [#allocation4], 1
    %195 = vsyncpa [#allocation5], 1

</llo_original>
